<compile_context>
chip_gen: v5e
topology: v5e:2x2
jax: 0.10.0
libtpu: 0.0.40
codegen_flags: <defaults>
</compile_context>

<pallas_src>
import functools

import jax
import jax.numpy as jnp
from jax.experimental import pallas as pl
from jax.experimental.pallas import tpu as pltpu

N_EMBD = 64
HIDDEN = 4 * N_EMBD          # 256
DROPOUT_P = 0.4
LN_EPS = 1e-5                # torch.nn.LayerNorm default eps
# keep with prob (1 - p): uint32 threshold compare, identical keep probability.
_KEEP_THRESHOLD = int((1.0 - DROPOUT_P) * (1 << 32))   # 2576980377


def _round_up(n, m):
    return ((n + m - 1) // m) * m


def _ffn_kernel(x_ref, w1_ref, b1_ref, g_ref, beta_ref, w2_ref, b2_ref,
                *rest, train):
    if train:
        bits_ref, o_ref = rest
    else:
        (o_ref,) = rest

    # Linear(C -> 4C): bf16 inputs, f32 accumulation (MXU bf16 path).
    x = x_ref[...].astype(jnp.bfloat16)                          # (TM, C)
    h = jnp.dot(x, w1_ref[...], preferred_element_type=jnp.float32)
    h = h + b1_ref[...]                                          # (TM, 4C) f32

    # LayerNorm over last dim (4C), biased variance, eps inside rsqrt (torch).
    mean = jnp.mean(h, axis=-1, keepdims=True)
    var = jnp.mean(jnp.square(h - mean), axis=-1, keepdims=True)
    h = (h - mean) * jax.lax.rsqrt(var + LN_EPS)
    h = h * g_ref[...] + beta_ref[...]

    # ReLU
    h = jnp.maximum(h, 0.0)

    # Linear(4C -> C): bf16 inputs, f32 accumulation.
    y = jnp.dot(h.astype(jnp.bfloat16), w2_ref[...],
                preferred_element_type=jnp.float32)
    y = y + b2_ref[...]

    # Dropout(p=0.4): integer threshold compare + single select.
    if train:
        keep = bits_ref[...] < jnp.uint32(_KEEP_THRESHOLD)
        y = jnp.where(keep, y * (1.0 / (1.0 - DROPOUT_P)), 0.0)

    o_ref[...] = y.astype(o_ref.dtype)


def feedforward_pallas(x, params, *, rng_key=None, train=True, block_m=2048):
    """x: (B, T, C) float32.  params: (w1, b1, gamma, beta, w2, b2) float32."""
    B, T, C = x.shape
    assert C == N_EMBD
    M = B * T
    w1, b1, gamma, beta, w2, b2 = params

    # Pick a row-block: multiple of 8 sublanes, no larger than padded M.
    bm = min(block_m, _round_up(M, 8))
    bm = max(8, _round_up(bm, 8))
    Mp = _round_up(M, bm)
    n_blocks = Mp // bm

    x2 = x.reshape(M, C)
    if Mp != M:
        x2 = jnp.pad(x2, ((0, Mp - M), (0, 0)))

    # Weights in bf16 (halves DMA bytes, native MXU path); vectors stay f32.
    w1_bf = w1.astype(jnp.bfloat16)
    w2_bf = w2.astype(jnp.bfloat16)
    b1_2d = b1.reshape(1, HIDDEN)
    g_2d = gamma.reshape(1, HIDDEN)
    be_2d = beta.reshape(1, HIDDEN)
    b2_2d = b2.reshape(1, C)

    in_specs = [
        pl.BlockSpec((bm, C), lambda i: (i, 0)),        # x rows
        pl.BlockSpec((C, HIDDEN), lambda i: (0, 0)),    # W1 (resident)
        pl.BlockSpec((1, HIDDEN), lambda i: (0, 0)),    # b1
        pl.BlockSpec((1, HIDDEN), lambda i: (0, 0)),    # gamma
        pl.BlockSpec((1, HIDDEN), lambda i: (0, 0)),    # beta
        pl.BlockSpec((HIDDEN, C), lambda i: (0, 0)),    # W2 (resident)
        pl.BlockSpec((1, C), lambda i: (0, 0)),         # b2
    ]
    args = [x2, w1_bf, b1_2d, g_2d, be_2d, w2_bf, b2_2d]

    bits_bytes = 0
    if train:
        if rng_key is None:
            rng_key = jax.random.PRNGKey(0)
        bits = jax.random.bits(rng_key, (Mp, C), dtype=jnp.uint32)
        in_specs.append(pl.BlockSpec((bm, C), lambda i: (i, 0)))
        args.append(bits)
        bits_bytes = Mp * C * 4

    weight_bytes = (w1_bf.size + w2_bf.size) * 2 + (b1.size + gamma.size + beta.size + b2.size) * 4
    cost = pl.CostEstimate(
        flops=4 * Mp * C * HIDDEN,                      # 2*M*(C*4C) + 2*M*(4C*C)
        transcendentals=Mp,                             # rsqrt per row
        bytes_accessed=Mp * C * 4 * 2 + weight_bytes + bits_bytes,
    )

    out = pl.pallas_call(
        functools.partial(_ffn_kernel, train=train),
        out_shape=jax.ShapeDtypeStruct((Mp, C), x.dtype),
        grid_spec=pltpu.PrefetchScalarGridSpec(
            num_scalar_prefetch=0,
            grid=(n_blocks,),
            in_specs=in_specs,
            out_specs=pl.BlockSpec((bm, C), lambda i: (i, 0)),
        ),
        compiler_params=pltpu.CompilerParams(
            dimension_semantics=("parallel",)),
        cost_estimate=cost,
    )(*args)

    return out[:M].reshape(B, T, C)


def init_params(key):
    """Deterministic init matching torch defaults (shapes from __init__)."""
    k1, k2, k3, k4 = jax.random.split(key, 4)
    lim1 = 1.0 / (N_EMBD ** 0.5)
    w1 = jax.random.uniform(k1, (N_EMBD, HIDDEN), jnp.float32, -lim1, lim1)
    b1 = jax.random.uniform(k2, (HIDDEN,), jnp.float32, -lim1, lim1)
    gamma = jnp.ones((HIDDEN,), jnp.float32)
    beta = jnp.zeros((HIDDEN,), jnp.float32)
    lim2 = 1.0 / (HIDDEN ** 0.5)
    w2 = jax.random.uniform(k3, (HIDDEN, N_EMBD), jnp.float32, -lim2, lim2)
    b2 = jax.random.uniform(k4, (N_EMBD,), jnp.float32, -lim2, lim2)
    return (w1, b1, gamma, beta, w2, b2)


def feedforward_ref(x, params):
    """Pure-JAX reference (eval mode), mimicking the bf16-matmul precision."""
    w1, b1, gamma, beta, w2, b2 = params
    h = jnp.dot(x.astype(jnp.bfloat16), w1.astype(jnp.bfloat16),
                preferred_element_type=jnp.float32) + b1
    mean = jnp.mean(h, axis=-1, keepdims=True)
    var = jnp.mean(jnp.square(h - mean), axis=-1, keepdims=True)
    h = (h - mean) / jnp.sqrt(var + LN_EPS)
    h = h * gamma + beta
    h = jnp.maximum(h, 0.0)
    return jnp.dot(h.astype(jnp.bfloat16), w2.astype(jnp.bfloat16),
                   preferred_element_type=jnp.float32) + b2


if __name__ == "__main__":
    key = jax.random.PRNGKey(0)
    kx, kp, kd = jax.random.split(key, 3)
    B, T = 2, 8
    x = jax.random.normal(kx, (B, T, N_EMBD), jnp.float32)
    params = init_params(kp)

    # Eval mode (dropout identity) — check against pure-JAX reference.
    out_eval = feedforward_pallas(x, params, train=False)
    out_eval = jax.block_until_ready(out_eval)
    ref = feedforward_ref(x, params)
    assert out_eval.shape == (B, T, N_EMBD)
    assert jnp.allclose(out_eval, ref, atol=2e-3, rtol=2e-3), (
        float(jnp.max(jnp.abs(out_eval - ref))))

    # Train mode — dropout via uint32 threshold compare on streamed bits.
    out_train = feedforward_pallas(x, params, rng_key=kd, train=True)
    out_train = jax.block_until_ready(out_train)
    assert out_train.shape == (B, T, N_EMBD)
    assert bool(jnp.all(jnp.isfinite(out_train)))
    zero_frac = float(jnp.mean(out_train == 0.0))
    assert 0.25 <= zero_frac <= 0.55, zero_frac   # p=0.4, 1024 elements

    print("KERNEL_OK")
</pallas_src>

<mosaic_0001>
module attributes {stable_mosaic.version = 11 : i64} {
  func.func @_ffn_kernel(%arg0: i32, %arg1: memref<16x64xf32, #tpu.memory_space<vmem>>, %arg2: memref<64x256xbf16, #tpu.memory_space<vmem>>, %arg3: memref<1x256xf32, #tpu.memory_space<vmem>>, %arg4: memref<1x256xf32, #tpu.memory_space<vmem>>, %arg5: memref<1x256xf32, #tpu.memory_space<vmem>>, %arg6: memref<256x64xbf16, #tpu.memory_space<vmem>>, %arg7: memref<1x64xf32, #tpu.memory_space<vmem>>, %arg8: memref<16x64xf32, #tpu.memory_space<vmem>>) attributes {dimension_semantics = [#tpu.dimension_semantics<parallel>], iteration_bounds = array<i64: 1>, scalar_prefetch = 0 : i64, scratch_operands = 0 : i64, tpu.core_type = #tpu.core_type<tc>, window_params = [{transform_indices = @transform_0, window_bounds = array<i64: 16, 64>}, {pipeline_mode = #tpu.pipeline_mode<synchronous>, transform_indices = @transform_1, window_bounds = array<i64: 64, 256>}, {pipeline_mode = #tpu.pipeline_mode<synchronous>, transform_indices = @transform_2, window_bounds = array<i64: 1, 256>}, {pipeline_mode = #tpu.pipeline_mode<synchronous>, transform_indices = @transform_3, window_bounds = array<i64: 1, 256>}, {pipeline_mode = #tpu.pipeline_mode<synchronous>, transform_indices = @transform_4, window_bounds = array<i64: 1, 256>}, {pipeline_mode = #tpu.pipeline_mode<synchronous>, transform_indices = @transform_5, window_bounds = array<i64: 256, 64>}, {pipeline_mode = #tpu.pipeline_mode<synchronous>, transform_indices = @transform_6, window_bounds = array<i64: 1, 64>}, {transform_indices = @transform_7, window_bounds = array<i64: 16, 64>}]} {
    %c0 = arith.constant 0 : index
    %c0_0 = arith.constant 0 : index
    %0 = vector.load %arg1[%c0, %c0_0] : memref<16x64xf32, #tpu.memory_space<vmem>>, vector<16x64xf32>
    %1 = arith.truncf %0 : vector<16x64xf32> to vector<16x64xbf16>
    %c0_1 = arith.constant 0 : index
    %c0_2 = arith.constant 0 : index
    %2 = vector.load %arg2[%c0_1, %c0_2] : memref<64x256xbf16, #tpu.memory_space<vmem>>, vector<64x256xbf16>
    %cst = arith.constant dense<0.000000e+00> : vector<16x256xf32>
    %3 = tpu.matmul %1, %2, %cst {dimension_numbers = #tpu.dot_dimension_numbers<[1], [0], [0], [1], [0, 0, 1, 1], [], []>} : vector<16x64xbf16>, vector<64x256xbf16>, vector<16x256xf32> -> vector<16x256xf32>
    %c0_3 = arith.constant 0 : index
    %c0_4 = arith.constant 0 : index
    %4 = vector.load %arg3[%c0_3, %c0_4] : memref<1x256xf32, #tpu.memory_space<vmem>>, vector<1x256xf32>
    %5 = vector.broadcast %4 : vector<1x256xf32> to vector<16x256xf32>
    %6 = arith.addf %3, %5 : vector<16x256xf32>
    %cst_5 = arith.constant dense<0.000000e+00> : vector<16xf32>
    %7 = vector.multi_reduction <add>, %6, %cst_5 [1] : vector<16x256xf32> to vector<16xf32>
    %8 = vector.shape_cast %7 : vector<16xf32> to vector<16x1xf32>
    %cst_6 = arith.constant 2.560000e+02 : f32
    %9 = vector.broadcast %cst_6 : f32 to vector<16x1xf32>
    %10 = arith.divf %8, %9 : vector<16x1xf32>
    %11 = vector.broadcast %10 : vector<16x1xf32> to vector<16x256xf32>
    %12 = arith.subf %6, %11 : vector<16x256xf32>
    %13 = arith.mulf %12, %12 : vector<16x256xf32>
    %cst_7 = arith.constant dense<0.000000e+00> : vector<16xf32>
    %14 = vector.multi_reduction <add>, %13, %cst_7 [1] : vector<16x256xf32> to vector<16xf32>
    %15 = vector.shape_cast %14 : vector<16xf32> to vector<16x1xf32>
    %cst_8 = arith.constant 2.560000e+02 : f32
    %16 = vector.broadcast %cst_8 : f32 to vector<16x1xf32>
    %17 = arith.divf %15, %16 : vector<16x1xf32>
    %18 = vector.broadcast %10 : vector<16x1xf32> to vector<16x256xf32>
    %19 = arith.subf %6, %18 : vector<16x256xf32>
    %cst_9 = arith.constant 9.99999974E-6 : f32
    %20 = vector.broadcast %cst_9 : f32 to vector<16x1xf32>
    %21 = arith.addf %17, %20 : vector<16x1xf32>
    %22 = math.rsqrt %21 : vector<16x1xf32>
    %23 = vector.broadcast %22 : vector<16x1xf32> to vector<16x256xf32>
    %24 = arith.mulf %19, %23 : vector<16x256xf32>
    %c0_10 = arith.constant 0 : index
    %c0_11 = arith.constant 0 : index
    %25 = vector.load %arg4[%c0_10, %c0_11] : memref<1x256xf32, #tpu.memory_space<vmem>>, vector<1x256xf32>
    %26 = vector.broadcast %25 : vector<1x256xf32> to vector<16x256xf32>
    %27 = arith.mulf %24, %26 : vector<16x256xf32>
    %c0_12 = arith.constant 0 : index
    %c0_13 = arith.constant 0 : index
    %28 = vector.load %arg5[%c0_12, %c0_13] : memref<1x256xf32, #tpu.memory_space<vmem>>, vector<1x256xf32>
    %29 = vector.broadcast %28 : vector<1x256xf32> to vector<16x256xf32>
    %30 = arith.addf %27, %29 : vector<16x256xf32>
    %cst_14 = arith.constant 0.000000e+00 : f32
    %31 = vector.broadcast %cst_14 : f32 to vector<16x256xf32>
    %32 = arith.maximumf %30, %31 : vector<16x256xf32>
    %33 = arith.truncf %32 : vector<16x256xf32> to vector<16x256xbf16>
    %c0_15 = arith.constant 0 : index
    %c0_16 = arith.constant 0 : index
    %34 = vector.load %arg6[%c0_15, %c0_16] : memref<256x64xbf16, #tpu.memory_space<vmem>>, vector<256x64xbf16>
    %cst_17 = arith.constant dense<0.000000e+00> : vector<16x64xf32>
    %35 = tpu.matmul %33, %34, %cst_17 {dimension_numbers = #tpu.dot_dimension_numbers<[1], [0], [0], [1], [0, 0, 1, 1], [], []>} : vector<16x256xbf16>, vector<256x64xbf16>, vector<16x64xf32> -> vector<16x64xf32>
    %c0_18 = arith.constant 0 : index
    %c0_19 = arith.constant 0 : index
    %36 = vector.load %arg7[%c0_18, %c0_19] : memref<1x64xf32, #tpu.memory_space<vmem>>, vector<1x64xf32>
    %37 = vector.broadcast %36 : vector<1x64xf32> to vector<16x64xf32>
    %38 = arith.addf %35, %37 : vector<16x64xf32>
    %c0_20 = arith.constant 0 : index
    %c0_21 = arith.constant 0 : index
    %39 = vector.load %arg8[%c0_20, %c0_21] : memref<16x64xf32, #tpu.memory_space<vmem>>, vector<16x64xf32>
    tpu.vector_store %arg8[%c0_20, %c0_21], %38 {strides = array<i32>} : memref<16x64xf32, #tpu.memory_space<vmem>>, vector<16x64xf32>,
    return
  }
  func.func @transform_0(%arg0: i32) -> (i32, i32) {
    %c0_i32 = arith.constant 0 : i32
    %c0_i32_0 = arith.constant 0 : i32
    return %arg0, %c0_i32 : i32, i32
  }
  func.func @transform_1(%arg0: i32) -> (i32, i32) {
    %c0_i32 = arith.constant 0 : i32
    %c0_i32_0 = arith.constant 0 : i32
    %c0_i32_1 = arith.constant 0 : i32
    return %c0_i32, %c0_i32_0 : i32, i32
  }
  func.func @transform_2(%arg0: i32) -> (i32, i32) {
    %c0_i32 = arith.constant 0 : i32
    %c0_i32_0 = arith.constant 0 : i32
    %c0_i32_1 = arith.constant 0 : i32
    return %c0_i32, %c0_i32_0 : i32, i32
  }
  func.func @transform_3(%arg0: i32) -> (i32, i32) {
    %c0_i32 = arith.constant 0 : i32
    %c0_i32_0 = arith.constant 0 : i32
    %c0_i32_1 = arith.constant 0 : i32
    return %c0_i32, %c0_i32_0 : i32, i32
  }
  func.func @transform_4(%arg0: i32) -> (i32, i32) {
    %c0_i32 = arith.constant 0 : i32
    %c0_i32_0 = arith.constant 0 : i32
    %c0_i32_1 = arith.constant 0 : i32
    return %c0_i32, %c0_i32_0 : i32, i32
  }
  func.func @transform_5(%arg0: i32) -> (i32, i32) {
    %c0_i32 = arith.constant 0 : i32
    %c0_i32_0 = arith.constant 0 : i32
    %c0_i32_1 = arith.constant 0 : i32
    return %c0_i32, %c0_i32_0 : i32, i32
  }
  func.func @transform_6(%arg0: i32) -> (i32, i32) {
    %c0_i32 = arith.constant 0 : i32
    %c0_i32_0 = arith.constant 0 : i32
    %c0_i32_1 = arith.constant 0 : i32
    return %c0_i32, %c0_i32_0 : i32, i32
  }
  func.func @transform_7(%arg0: i32) -> (i32, i32) {
    %c0_i32 = arith.constant 0 : i32
    %c0_i32_0 = arith.constant 0 : i32
    return %arg0, %c0_i32 : i32, i32
  }
}

</mosaic_0001>

<llo_original>
// kernel: tpu_custom_call.1
$region0: #{tpu_custom_call.1}
  #allocation0 [shape = 'u32[]', space=smem, size = 0x4, offset = 0x4, fixed_abs, tag = 'smem constant byte address 0x4 - core index']
  #allocation1 [shape = 'u32[72,128]{1,0:T(1,128)}', space=vmem, size = 0x9000, scoped, tag = 'internal scratch']
  %s0 = inlined_call_operand.vmem [shape: f32[16,64], index: 0, kind: input, shape index: {}]
  %s1 = inlined_call_operand.vmem [shape: bf16[64,256], index: 1, kind: input, shape index: {}]
  %s2 = inlined_call_operand.vmem [shape: f32[1,256], index: 2, kind: input, shape index: {}]
  %s3 = inlined_call_operand.vmem [shape: f32[1,256], index: 3, kind: input, shape index: {}]
  %s4 = inlined_call_operand.vmem [shape: f32[1,256], index: 4, kind: input, shape index: {}]
  %s5 = inlined_call_operand.vmem [shape: bf16[256,64], index: 5, kind: input, shape index: {}]
  %s6 = inlined_call_operand.vmem [shape: f32[1,64], index: 6, kind: input, shape index: {}]
  %s7 = inlined_call_operand.hbm [shape: f32[16,64], index: 7, kind: output, shape index: {}]
  %s8 = sld [smem:[#allocation0]]
  $region38: #{tpu_custom_call.1} parent=0
    _
  %s10 = ssub.s32 1, %s8
  %s11 = scalar_select 0, %s10, %s8
  $region1: #{tpu_custom_call.1} parent=0
    #allocation2 [shape = 'u8[8192]{0}', space=vmem, size = 0x2000, scoped, tag = 'output window, operand 0, single buffered']
    #allocation3 [shape = 's32[1]{0}', space=sflag, size = 0x4, scoped, tag = 'scoped memory for tpu_custom_call.1']
    %12 = vsyncpa [#allocation3], 0
    // Predicated region
    $region2: #{tpu_custom_call.1} parent=1 // pred_check
      _
    $region3: #{tpu_custom_call.1} parent=1 // pred_check_branch
      %14 = sbr.rel (0) target = $region5
    $region4: #{tpu_custom_call.1} parent=1 // pred_region
      _
    $region5: #{tpu_custom_call.1} parent=1 // pred_fallthru
      _
    // Predicated region
    $region6: #{tpu_custom_call.1} parent=1 // pred_check
      _
    $region7: #{tpu_custom_call.1} parent=1 // pred_check_branch
      %16 = sbr.rel (0) target = $region9
    $region8: #{tpu_custom_call.1} parent=1 // pred_region
      _
    $region9: #{tpu_custom_call.1} parent=1 // pred_fallthru
      _
    // Predicated region
    $region10: #{tpu_custom_call.1} parent=1 // pred_check
      _
    $region11: #{tpu_custom_call.1} parent=1 // pred_check_branch
      %18 = sbr.rel (0) target = $region13
    $region12: #{tpu_custom_call.1} parent=1 // pred_region
      _
    $region13: #{tpu_custom_call.1} parent=1 // pred_fallthru
      _
    // Predicated region
    $region14: #{tpu_custom_call.1} parent=1 // pred_check
      _
    $region15: #{tpu_custom_call.1} parent=1 // pred_check_branch
      %20 = sbr.rel (0) target = $region17
    $region16: #{tpu_custom_call.1} parent=1 // pred_region
      _
    $region17: #{tpu_custom_call.1} parent=1 // pred_fallthru
      _
    // Predicated region
    $region18: #{tpu_custom_call.1} parent=1 // pred_check
      _
    $region19: #{tpu_custom_call.1} parent=1 // pred_check_branch
      %22 = sbr.rel (0) target = $region21
    $region20: #{tpu_custom_call.1} parent=1 // pred_region
      _
    $region21: #{tpu_custom_call.1} parent=1 // pred_fallthru
      _
    // Predicated region
    $region22: #{tpu_custom_call.1} parent=1 // pred_check
      _
    $region23: #{tpu_custom_call.1} parent=1 // pred_check_branch
      %24 = sbr.rel (0) target = $region25
    $region24: #{tpu_custom_call.1} parent=1 // pred_region
      _
    $region25: #{tpu_custom_call.1} parent=1 // pred_fallthru
      _
    // Predicated region
    $region26: #{tpu_custom_call.1} parent=1 // pred_check
      _
    $region27: #{tpu_custom_call.1} parent=1 // pred_check_branch
      %26 = sbr.rel (0) target = $region29
    $region28: #{tpu_custom_call.1} parent=1 // pred_region
      _
    $region29: #{tpu_custom_call.1} parent=1 // pred_fallthru
      _
    %v28 = vld [vmem:[%s0] sm:$0xff]
    %v29 = vld [vmem:[%s0 + $0x8] sm:$0xff]
    %v30 = vpack.c.bf16 %v29, %v28
    %v31 = vld [vmem:[%s1] sm:$0xff]
    %v32 = vld [vmem:[%s1 + $0x8] sm:$0xff]
    %v33 = vld [vmem:[%s1 + $0x10] sm:$0xff]
    %v34 = vld [vmem:[%s1 + $0x18] sm:$0xff]
    %v35 = vld [vmem:[%s1 + $0x20] sm:$0xff]
    %v36 = vld [vmem:[%s1 + $0x28] sm:$0xff]
    %v37 = vld [vmem:[%s1 + $0x30] sm:$0xff]
    %v38 = vld [vmem:[%s1 + $0x38] sm:$0xff]
    %v39 = vld [vmem:[%s2] sm:$0x3]
    %v41 = vperm.slane %v39, 0
    %v42 = vperm.slane %v39, 1
    %v53 = vunpack.c.l.b16 %v31
    %v54 = vunpack.c.h.b16 %v31
    %v55 = vunpack.c.l.b16 %v32
    %v56 = vunpack.c.h.b16 %v32
    %v57 = vunpack.c.l.b16 %v33
    %v58 = vunpack.c.h.b16 %v33
    %v59 = vunpack.c.l.b16 %v34
    %v60 = vunpack.c.h.b16 %v34
    %v61 = vunpack.c.l.b16 %v35
    %v62 = vunpack.c.h.b16 %v35
    %v63 = vunpack.c.l.b16 %v36
    %v64 = vunpack.c.h.b16 %v36
    %v65 = vunpack.c.l.b16 %v37
    %v66 = vunpack.c.h.b16 %v37
    %v67 = vunpack.c.l.b16 %v38
    %v68 = vunpack.c.h.b16 %v38
    %v69 = vpack.c.b16 %v55, %v53
    %v70 = vpack.c.b16 %v56, %v54
    %v71 = vpack.c.b16 %v59, %v57
    %v72 = vpack.c.b16 %v60, %v58
    %v73 = vpack.c.b16 %v63, %v61
    %v74 = vpack.c.b16 %v64, %v62
    %v75 = vpack.c.b16 %v67, %v65
    %v76 = vpack.c.b16 %v68, %v66
    %vm85 = vcmask 523264
    %v87 = vsel %vm85, %v30, 0
    %89 = vmatpush.bf16.msra.mxu0 0
    %90 = vmatpush.bf16.msra.mxu0 0
    %91 = vmatpush.bf16.msra.mxu0 0
    %92 = vmatpush.bf16.msra.mxu0 0
    %93 = vmatpush.bf16.msra.mxu0 %v75
    %94 = vmatpush.bf16.msra.mxu0 %v73
    %95 = vmatpush.bf16.msra.mxu0 %v71
    %96 = vmatpush.bf16.msra.mxu0 %v69
    %97 = vmatmul.bf16.gmra.mxu0 %v87
    %v98 = vpop.f32.mrf.mxu0
    %v99 = vadd.f32 %v41, %v98
    %v100 = vpop.f32.mrf.mxu0
    %v101 = vadd.f32 %v41, %v100
    %102 = vdwg.mxu0
    %103 = vmatpush.bf16.msra.mxu0 0
    %104 = vmatpush.bf16.msra.mxu0 0
    %105 = vmatpush.bf16.msra.mxu0 0
    %106 = vmatpush.bf16.msra.mxu0 0
    %107 = vmatpush.bf16.msra.mxu0 %v76
    %108 = vmatpush.bf16.msra.mxu0 %v74
    %109 = vmatpush.bf16.msra.mxu0 %v72
    %110 = vmatpush.bf16.msra.mxu0 %v70
    %111 = vmatmul.bf16.gmra.mxu0 %v87
    %v112 = vpop.f32.mrf.mxu0
    %v113 = vadd.f32 %v42, %v112
    %v114 = vpop.f32.mrf.mxu0
    %v115 = vadd.f32 %v42, %v114
    %116 = vdwg.mxu0
    %v117 = vadd.f32 %v99, %v113
    %118 = vadd.xlane.f32.xlu0 %v117
    %v119 = vpop.xlane.xlu0 %118
    %v120 = vadd.f32 %v101, %v115
    %121 = vadd.xlane.f32.xlu0 %v120
    %v122 = vpop.xlane.xlu0 %121
    %v123 = vrcp.pop 256.0
    %v124 = vmul.f32 256.0, %v123
    %v125 = vsub.f32 1.0, %v124
    %v126 = vmul.f32 %v123, %v125
    %v127 = vadd.f32 %v123, %v126
    %vm128 = vweird.f32 %v123
    %v129 = vsel %vm128, %v123, %v127
    %v130 = vmul.f32 %v119, %v129
    %v131 = vmul.f32 %v122, %v129
    %v132 = vsub.f32 %v99, %v130
    %v133 = vsub.f32 %v113, %v130
    %v134 = vsub.f32 %v101, %v131
    %v135 = vsub.f32 %v115, %v131
    %v136 = vmul.f32 %v132, %v132
    %v137 = vmul.f32 %v133, %v133
    %v138 = vmul.f32 %v134, %v134
    %v139 = vmul.f32 %v135, %v135
    %v140 = vadd.f32 %v136, %v137
    %141 = vadd.xlane.f32.xlu0 %v140
    %v142 = vpop.xlane.xlu0 %141
    %v143 = vadd.f32 %v138, %v139
    %144 = vadd.xlane.f32.xlu0 %v143
    %v145 = vpop.xlane.xlu0 %144
    %v146 = vmul.f32 %v142, %v129
    %v147 = vmul.f32 %v145, %v129
    %v148 = vadd.f32 %v146, 1e-05
    %v149 = vadd.f32 %v147, 1e-05
    %v150 = vrsqrt.pop %v148
    %v151 = vmul.f32 %v150, %v148
    %v152 = vmul.f32 %v151, %v150
    %v153 = vmul.f32 0.5, %v152
    %v154 = vsub.f32 1.5, %v153
    %v155 = vmul.f32 %v150, %v154
    %vm156 = vweird.f32 %v148
    %vm157 = vweird.f32 %v150
    %vm158 = vmor %vm156, %vm157
    %v159 = vsel %vm158, %v150, %v155
    %v160 = vrsqrt.pop %v149
    %v161 = vmul.f32 %v160, %v149
    %v162 = vmul.f32 %v161, %v160
    %v163 = vmul.f32 0.5, %v162
    %v164 = vsub.f32 1.5, %v163
    %v165 = vmul.f32 %v160, %v164
    %vm166 = vweird.f32 %v149
    %vm167 = vweird.f32 %v160
    %vm168 = vmor %vm166, %vm167
    %v169 = vsel %vm168, %v160, %v165
    %v170 = vmul.f32 %v132, %v159
    %v171 = vmul.f32 %v133, %v159
    %v172 = vmul.f32 %v134, %v169
    %v173 = vmul.f32 %v135, %v169
    %v174 = vld [vmem:[%s3] sm:$0x3]
    %v176 = vperm.slane %v174, 0
    %v177 = vperm.slane %v174, 1
    %v180 = vmul.f32 %v170, %v176
    %v181 = vmul.f32 %v171, %v177
    %v182 = vmul.f32 %v172, %v176
    %v183 = vmul.f32 %v173, %v177
    %v184 = vld [vmem:[%s4] sm:$0x3]
    %v186 = vperm.slane %v184, 0
    %v187 = vperm.slane %v184, 1
    %v190 = vadd.f32 %v180, %v186
    %v191 = vadd.f32 %v181, %v187
    %v192 = vadd.f32 %v182, %v186
    %v193 = vadd.f32 %v183, %v187
    %v194 = vmax.f32 %v190, 0.0
    %v195 = vmax.f32 %v191, 0.0
    %v196 = vmax.f32 %v192, 0.0
    %v197 = vmax.f32 %v193, 0.0
    %v198 = vpack.c.bf16 %v196, %v194
    %v199 = vpack.c.bf16 %v197, %v195
    %v200 = vld [vmem:[%s5] sm:$0xf]
    %v201 = vld [vmem:[%s5 + $0x4] sm:$0xf]
    %v202 = vld [vmem:[%s5 + $0x8] sm:$0xf]
    %v203 = vld [vmem:[%s5 + $0xc] sm:$0xf]
    %v204 = vld [vmem:[%s5 + $0x10] sm:$0xf]
    %v205 = vld [vmem:[%s5 + $0x14] sm:$0xf]
    %v206 = vld [vmem:[%s5 + $0x18] sm:$0xf]
    %v207 = vld [vmem:[%s5 + $0x1c] sm:$0xf]
    %v208 = vld [vmem:[%s5 + $0x20] sm:$0xf]
    %v209 = vld [vmem:[%s5 + $0x24] sm:$0xf]
    %v210 = vld [vmem:[%s5 + $0x28] sm:$0xf]
    %v211 = vld [vmem:[%s5 + $0x2c] sm:$0xf]
    %v212 = vld [vmem:[%s5 + $0x30] sm:$0xf]
    %v213 = vld [vmem:[%s5 + $0x34] sm:$0xf]
    %v214 = vld [vmem:[%s5 + $0x38] sm:$0xf]
    %v215 = vld [vmem:[%s5 + $0x3c] sm:$0xf]
    %v216 = vld [vmem:[%s5 + $0x40] sm:$0xf]
    %v217 = vld [vmem:[%s5 + $0x44] sm:$0xf]
    %v218 = vld [vmem:[%s5 + $0x48] sm:$0xf]
    %v219 = vld [vmem:[%s5 + $0x4c] sm:$0xf]
    %v220 = vld [vmem:[%s5 + $0x50] sm:$0xf]
    %v221 = vld [vmem:[%s5 + $0x54] sm:$0xf]
    %v222 = vld [vmem:[%s5 + $0x58] sm:$0xf]
    %v223 = vld [vmem:[%s5 + $0x5c] sm:$0xf]
    %v224 = vld [vmem:[%s5 + $0x60] sm:$0xf]
    %v225 = vld [vmem:[%s5 + $0x64] sm:$0xf]
    %v226 = vld [vmem:[%s5 + $0x68] sm:$0xf]
    %v227 = vld [vmem:[%s5 + $0x6c] sm:$0xf]
    %v228 = vld [vmem:[%s5 + $0x70] sm:$0xf]
    %v229 = vld [vmem:[%s5 + $0x74] sm:$0xf]
    %v230 = vld [vmem:[%s5 + $0x78] sm:$0xf]
    %v231 = vld [vmem:[%s5 + $0x7c] sm:$0xf]
    %v232 = vld [vmem:[%s6] sm:$0x1]
    %v234 = vperm.slane %v232, 0
    %v268 = vunpack.c.l.b16 %v200
    %v269 = vunpack.c.l.b16 %v201
    %v270 = vunpack.c.l.b16 %v202
    %v271 = vunpack.c.l.b16 %v203
    %v272 = vunpack.c.l.b16 %v204
    %v273 = vunpack.c.l.b16 %v205
    %v274 = vunpack.c.l.b16 %v206
    %v275 = vunpack.c.l.b16 %v207
    %v276 = vunpack.c.l.b16 %v208
    %v277 = vunpack.c.l.b16 %v209
    %v278 = vunpack.c.l.b16 %v210
    %v279 = vunpack.c.l.b16 %v211
    %v280 = vunpack.c.l.b16 %v212
    %v281 = vunpack.c.l.b16 %v213
    %v282 = vunpack.c.l.b16 %v214
    %v283 = vunpack.c.l.b16 %v215
    %v284 = vunpack.c.l.b16 %v216
    %v285 = vunpack.c.l.b16 %v217
    %v286 = vunpack.c.l.b16 %v218
    %v287 = vunpack.c.l.b16 %v219
    %v288 = vunpack.c.l.b16 %v220
    %v289 = vunpack.c.l.b16 %v221
    %v290 = vunpack.c.l.b16 %v222
    %v291 = vunpack.c.l.b16 %v223
    %v292 = vunpack.c.l.b16 %v224
    %v293 = vunpack.c.l.b16 %v225
    %v294 = vunpack.c.l.b16 %v226
    %v295 = vunpack.c.l.b16 %v227
    %v296 = vunpack.c.l.b16 %v228
    %v297 = vunpack.c.l.b16 %v229
    %v298 = vunpack.c.l.b16 %v230
    %v299 = vunpack.c.l.b16 %v231
    %v300 = vpack.c.b16 %v269, %v268
    %v301 = vpack.c.b16 %v271, %v270
    %v302 = vpack.c.b16 %v273, %v272
    %v303 = vpack.c.b16 %v275, %v274
    %v304 = vpack.c.b16 %v277, %v276
    %v305 = vpack.c.b16 %v279, %v278
    %v306 = vpack.c.b16 %v281, %v280
    %v307 = vpack.c.b16 %v283, %v282
    %v308 = vpack.c.b16 %v285, %v284
    %v309 = vpack.c.b16 %v287, %v286
    %v310 = vpack.c.b16 %v289, %v288
    %v311 = vpack.c.b16 %v291, %v290
    %v312 = vpack.c.b16 %v293, %v292
    %v313 = vpack.c.b16 %v295, %v294
    %v314 = vpack.c.b16 %v297, %v296
    %v315 = vpack.c.b16 %v299, %v298
    %332 = vmatpush.bf16.msra.mxu0 %v307
    %333 = vmatpush.bf16.msra.mxu0 %v306
    %334 = vmatpush.bf16.msra.mxu0 %v305
    %335 = vmatpush.bf16.msra.mxu0 %v304
    %336 = vmatpush.bf16.msra.mxu0 %v303
    %337 = vmatpush.bf16.msra.mxu0 %v302
    %338 = vmatpush.bf16.msra.mxu0 %v301
    %339 = vmatpush.bf16.msra.mxu0 %v300
    %340 = vmatmul.bf16.gmra.mxu0 %v198
    %v341 = vpop.f32.mrf.mxu0
    %v342 = vadd.f32 %v234, %v341
    %v343 = vpop.f32.mrf.mxu0
    %v344 = vadd.f32 %v234, %v343
    %345 = vdwg.mxu0
    %346 = vmatpush.bf16.msra.mxu0 %v315
    %347 = vmatpush.bf16.msra.mxu0 %v314
    %348 = vmatpush.bf16.msra.mxu0 %v313
    %349 = vmatpush.bf16.msra.mxu0 %v312
    %350 = vmatpush.bf16.msra.mxu0 %v311
    %351 = vmatpush.bf16.msra.mxu0 %v310
    %352 = vmatpush.bf16.msra.mxu0 %v309
    %353 = vmatpush.bf16.msra.mxu0 %v308
    %354 = vmatmul.bf16.gmra.mxu0 %v199
    %v355 = vpop.f32.mrf.mxu0
    %v356 = vadd.f32 %v342, %v355
    %v357 = vpop.f32.mrf.mxu0
    %v358 = vadd.f32 %v344, %v357
    %359 = vdwg.mxu0
    %360 = vst.msk [vmem:[#allocation2] sm:$0xff] %vm85, %v356
    %361 = vst.msk [vmem:[#allocation2 + $0x8] sm:$0xff] %vm85, %v358
    // Predicated region
    $region30: #{tpu_custom_call.1} parent=1 // pred_check
      _
    $region31: #{tpu_custom_call.1} parent=1 // pred_check_branch
      %363 = sbr.rel (0) target = $region33
    $region32: #{tpu_custom_call.1} parent=1 // pred_region
      %365 = vsyncadd [#allocation3], 0
      %s366 = sshll.u32 [#allocation2], 4
      %s367 = int_to_ptr.vmem [resolvable:$true] %s366
      %s368 = sshll.u32 %s7, 4
      %s369 = int_to_ptr.hbm [resolvable:$true] %s368
      %374 = dma.vmem_to_hbm [thread:$0]  %s367, 256, %s369, [#allocation3], 128, 128, 8
    $region33: #{tpu_custom_call.1} parent=1 // pred_fallthru
      _
    // Predicated region
    $region34: #{tpu_custom_call.1} parent=1 // pred_check
      _
    $region35: #{tpu_custom_call.1} parent=1 // pred_check_branch
      %376 = sbr.rel (0) target = $region37
    $region36: #{tpu_custom_call.1} parent=1 // pred_region
      %378 = dma.done [#allocation3], 256
    $region37: #{tpu_custom_call.1} parent=1 // pred_fallthru
      _
    %379 = vsyncpa [#allocation3], 1

</llo_original>
